<compile_context>
chip_gen: v7x
topology: tpu7x:2x2x1
jax: 0.10.0
libtpu: 0.0.40
codegen_flags: <defaults>
</compile_context>

<pallas_src>
import jax
import jax.numpy as jnp
from jax.experimental import pallas as pl
from jax.experimental.pallas import tpu as pltpu


# ------------------------------- copy kernel -------------------------------
def _copy_kernel(x_ref, o_ref):
    # Straight tile copy: VMEM load -> VMEM store, fully lane-dense.
    o_ref[...] = x_ref[...]


# --------------------------- identity (one array) --------------------------
_MAX_BLOCK_BYTES = 2 * 1024 * 1024  # ~2 MiB/block; 4 double-buffered blocks fit
                                    # v5e's 16 MiB default scoped VMEM limit.


def _pick_width(n):
    """Widest lane-dense (multiple of 128) last dim that divides the flat size."""
    for w in (8192, 4096, 2048, 1024, 512, 256, 128):
        if n % w == 0:
            return w
    return None


def _pick_row_tile(rows, bytes_per_row):
    """Largest multiple-of-8 divisor of `rows` keeping a block under budget."""
    if rows * bytes_per_row <= _MAX_BLOCK_BYTES:
        return rows                      # one block: full array, always legal
    max_rows = max(8, _MAX_BLOCK_BYTES // bytes_per_row)

    # Prefer power-of-two tiles (aligned DMAs, even grid).
    best = None
    t = 8
    while t <= max_rows:
        if rows % t == 0:
            best = t
        t *= 2
    if best is not None:
        return best

    # Bounded scan over multiple-of-8 divisors.
    cand = (max_rows // 8) * 8
    scanned = 0
    while cand >= 8 and scanned < 4096:
        if rows % cand == 0:
            return cand
        cand -= 8
        scanned += 1

    return rows  # pathological shapes: single big block (still correct)


def _identity_one(x):
    x = jnp.asarray(x)
    n = x.size
    if n == 0:
        return x

    width = _pick_width(n)
    if width is None:
        # Fallback: full-array single block (block_shape == array dims is legal
        # for any shape).  Only hit for tiny / oddly-sized tensors.
        x2 = x.reshape(1, n)
        out = pl.pallas_call(
            _copy_kernel,
            out_shape=jax.ShapeDtypeStruct((1, n), x.dtype),
        )(x2)
        return out.reshape(x.shape)

    rows = n // width
    bytes_per_row = width * x.dtype.itemsize
    tile_rows = _pick_row_tile(rows, bytes_per_row)
    grid = (rows // tile_rows,)

    x2 = x.reshape(rows, width)
    out = pl.pallas_call(
        _copy_kernel,
        out_shape=jax.ShapeDtypeStruct((rows, width), x.dtype),
        grid=grid,
        in_specs=[pl.BlockSpec((tile_rows, width), lambda i: (i, 0))],
        out_specs=pl.BlockSpec((tile_rows, width), lambda i: (i, 0)),
        compiler_params=pltpu.CompilerParams(
            dimension_semantics=("parallel",)),   # lets v7x shard across 2 TCs
    )(x2)
    return out.reshape(x.shape)


# ------------------------------ Identity.forward ----------------------------
def identity(*args):
    """Pallas equivalent of torch Identity: returns the single arg, or the tuple."""
    outs = tuple(_identity_one(a) for a in args)
    if len(outs) == 1:
        return outs[0]
    return outs


# ----------------------------------- test -----------------------------------
if __name__ == "__main__":
    key = jax.random.PRNGKey(0)
    k0, k1 = jax.random.split(key)

    # Single-arg path (flat size divisible by 128 -> tiled lane-dense copy).
    x = jax.random.normal(k0, (2, 4, 16, 16), jnp.float32)
    y = identity(x)
    jax.block_until_ready(y)
    assert y.shape == x.shape and y.dtype == x.dtype
    assert bool(jnp.all(y == x))

    # Multi-arg path, including a shape that exercises the full-block fallback.
    a = jax.random.normal(k1, (3, 5, 7), jnp.float32)
    outs = identity(x, a)
    jax.block_until_ready(outs)
    assert isinstance(outs, tuple) and len(outs) == 2
    assert bool(jnp.all(outs[0] == x))
    assert bool(jnp.all(outs[1] == a))

    print("KERNEL_OK")
</pallas_src>

<mosaic_0001>
module attributes {stable_mosaic.version = 11 : i64} {
  func.func @_copy_kernel(%arg0: i32, %arg1: memref<1x2048xf32, #tpu.memory_space<vmem>>, %arg2: memref<1x2048xf32, #tpu.memory_space<vmem>>) attributes {dimension_semantics = [#tpu.dimension_semantics<parallel>], iteration_bounds = array<i64: 1>, scalar_prefetch = 0 : i64, scratch_operands = 0 : i64, tpu.core_type = #tpu.core_type<tc>, window_params = [{transform_indices = @transform_0, window_bounds = array<i64: 1, 2048>}, {transform_indices = @transform_1, window_bounds = array<i64: 1, 2048>}]} {
    %c0 = arith.constant 0 : index
    %c0_0 = arith.constant 0 : index
    %0 = vector.load %arg1[%c0, %c0_0] : memref<1x2048xf32, #tpu.memory_space<vmem>>, vector<1x2048xf32>
    %c0_1 = arith.constant 0 : index
    %c0_2 = arith.constant 0 : index
    %1 = vector.load %arg2[%c0_1, %c0_2] : memref<1x2048xf32, #tpu.memory_space<vmem>>, vector<1x2048xf32>
    tpu.vector_store %arg2[%c0_1, %c0_2], %0 {strides = array<i32>} : memref<1x2048xf32, #tpu.memory_space<vmem>>, vector<1x2048xf32>,
    return
  }
  func.func @transform_0(%arg0: i32) -> (i32, i32) {
    %c0_i32 = arith.constant 0 : i32
    %c0_i32_0 = arith.constant 0 : i32
    return %arg0, %c0_i32 : i32, i32
  }
  func.func @transform_1(%arg0: i32) -> (i32, i32) {
    %c0_i32 = arith.constant 0 : i32
    %c0_i32_0 = arith.constant 0 : i32
    return %arg0, %c0_i32 : i32, i32
  }
}

</mosaic_0001>

<llo_original>
// kernel: tpu_custom_call.1
$region0: #{tpu_custom_call.1}
  #allocation0 [shape = 'u32[]', space=smem, size = 0x4, offset = 0x4, fixed_abs, tag = 'smem constant byte address 0x4 - core index']
  #allocation1 [shape = 'u32[144,128]{1,0:T(1,128)}', space=vmem, size = 0x12000, scoped, tag = 'internal scratch']
  %s0 = inlined_call_operand.hbm [shape: f32[1,2048], index: 0, kind: input, shape index: {}]
  %s1 = inlined_call_operand.hbm [shape: f32[1,2048], index: 1, kind: output, shape index: {}]
  %s2 = sld [smem:[#allocation0]]
  $region18: #{tpu_custom_call.1} parent=0
    _
  %s4 = ssub.s32 1, %s2
  %s5 = scalar_select 0, %s4, %s2
  $region1: #{tpu_custom_call.1} parent=0
    #allocation2 [shape = 'u8[8192]{0}', space=vmem, size = 0x2000, scoped, tag = 'input window, operand 0, single buffered']
    #allocation3 [shape = 's32[1]{0}', space=sflag, size = 0x4, scoped, tag = 'scoped memory for tpu_custom_call.1']
    #allocation4 [shape = 's32[1]{0}', space=sflag, size = 0x4, scoped, tag = 'scoped memory for tpu_custom_call.1']
    #allocation5 [shape = 'u8[8192]{0}', space=vmem, size = 0x2000, scoped, tag = 'output window, operand 0, single buffered']
    %6 = vsyncpa [#allocation3], 0
    %7 = vsyncpa [#allocation4], 0
    // Predicated region
    $region2: #{tpu_custom_call.1} parent=1 // pred_check
      _
    $region3: #{tpu_custom_call.1} parent=1 // pred_check_branch
      %9 = sbr.rel (0) target = $region5
    $region4: #{tpu_custom_call.1} parent=1 // pred_region
      %s11 = ssub.s32 256, 256
      %12 = vsyncadd [#allocation3], %s11
      %s14 = sshll.u32 [#allocation2], 4
      %s15 = int_to_ptr.vmem [resolvable:$true] %s14
      %17 = dma.hbm_to_vmem [thread:$0]  %s0, 256, %s15, [#allocation3]
    $region5: #{tpu_custom_call.1} parent=1 // pred_fallthru
      _
    // Predicated region
    $region6: #{tpu_custom_call.1} parent=1 // pred_check
      _
    $region7: #{tpu_custom_call.1} parent=1 // pred_check_branch
      %19 = sbr.rel (0) target = $region9
    $region8: #{tpu_custom_call.1} parent=1 // pred_region
      %20 = dma.done [#allocation3], 256
    $region9: #{tpu_custom_call.1} parent=1 // pred_fallthru
      _
    %v21 = vld [vmem:[#allocation2] sm:$0xff]
    %v22 = vld [vmem:[#allocation2 + $0x8] sm:$0xff]
    %23 = vst [vmem:[#allocation5] sm:$0xff] %v21
    %24 = vst [vmem:[#allocation5 + $0x8] sm:$0xff] %v22
    // Predicated region
    $region10: #{tpu_custom_call.1} parent=1 // pred_check
      _
    $region11: #{tpu_custom_call.1} parent=1 // pred_check_branch
      %26 = sbr.rel (0) target = $region13
    $region12: #{tpu_custom_call.1} parent=1 // pred_region
      %s28 = ssub.s32 256, 256
      %29 = vsyncadd [#allocation4], %s28
      %s31 = sshll.u32 [#allocation5], 4
      %s32 = int_to_ptr.vmem [resolvable:$true] %s31
      %34 = dma.vmem_to_hbm [thread:$0]  %s32, 256, %s1, [#allocation4]
    $region13: #{tpu_custom_call.1} parent=1 // pred_fallthru
      _
    // Predicated region
    $region14: #{tpu_custom_call.1} parent=1 // pred_check
      _
    $region15: #{tpu_custom_call.1} parent=1 // pred_check_branch
      %36 = sbr.rel (0) target = $region17
    $region16: #{tpu_custom_call.1} parent=1 // pred_region
      %37 = dma.done [#allocation4], 256
    $region17: #{tpu_custom_call.1} parent=1 // pred_fallthru
      _
    %38 = vsyncpa [#allocation3], 1
    %39 = vsyncpa [#allocation4], 1

</llo_original>
